<compile_context>
chip_gen: v6e
topology: v6e:2x2x1
jax: 0.10.0
libtpu: 0.0.40
codegen_flags: <defaults>
</compile_context>

<pallas_src>
import functools

import jax
import jax.numpy as jnp
from jax.experimental import pallas as pl
from jax.experimental.pallas import tpu as pltpu

_F32 = jnp.float32
_HIGHEST = jax.lax.Precision.HIGHEST


# ----------------------------------------------------------------------------
# helpers
# ----------------------------------------------------------------------------
def _vmem_capacity_bytes():
    """Physical VMEM per core; conservative fallback if the query is unavailable."""
    try:
        return int(pltpu.get_tpu_info().vmem_capacity_bytes)
    except Exception:
        return 64 << 20          # v7x-sized fallback: safe on every generation


def _sublane_unit(dtype):
    # sublane packing factor: f32 -> 8, bf16/fp16 -> 16, int8/fp8 -> 32
    return 8 * max(1, 4 // jnp.dtype(dtype).itemsize)


def _pick_tile(extent, unit, max_tile):
    # Full extent is always a legal block dim; otherwise use a multiple of
    # `unit` (Pallas handles the ragged tail block via the cdiv grid).
    if extent <= max_tile:
        return extent
    return max((max_tile // unit) * unit, unit)


# ----------------------------------------------------------------------------
# kernels
# ----------------------------------------------------------------------------
def _fused_kernel(v_ref, t_ref, w1vT_ref, w2v_ref, w1tT_ref, w2t_ref, out_ref,
                  *, inv_hw, use_residual):
    # v_ref / t_ref : (1, C, HW)    full per-batch slices, resident in VMEM
    # w1*T_ref      : (C, C//r)     first linear, pre-transposed from torch (out,in)
    # w2*_ref       : (C, C//r)     second linear in torch (out,in) layout
    # out_ref       : (1, 2, C, HW) fused output block (V half, T half)
    v = v_ref[0].astype(_F32)                                   # (C, HW)
    t = t_ref[0].astype(_F32)

    # Global average pool over the spatial (lane) axis -> column vectors (C, 1).
    v_pool = jnp.sum(v, axis=-1, keepdims=True) * inv_hw
    t_pool = jnp.sum(t, axis=-1, keepdims=True) * inv_hw

    # Cross-branch bottleneck MLPs, exact f32 on the VPU (no MXU demotion):
    #   hidden_j = relu( sum_c w1[j, c] * pool[c] )      -> (1, C//r)
    #   gate_c   = sigmoid( sum_j w2[c, j] * hidden_j )  -> (C, 1)
    # fc_t(T_pool) gates V ; fc_v(V_pool) gates T.
    hv = jnp.maximum(
        jnp.sum(w1tT_ref[...] * t_pool, axis=0, keepdims=True), 0.0)
    gate_v = jax.nn.sigmoid(
        jnp.sum(w2t_ref[...] * hv, axis=-1, keepdims=True))
    ht = jnp.maximum(
        jnp.sum(w1vT_ref[...] * v_pool, axis=0, keepdims=True), 0.0)
    gate_t = jax.nn.sigmoid(
        jnp.sum(w2v_ref[...] * ht, axis=-1, keepdims=True))

    if use_residual:                       # fold residual:  x + x*g == x*(1+g)
        gate_v = gate_v + 1.0
        gate_t = gate_t + 1.0

    out_ref[0, 0, :, :] = (v * gate_v).astype(out_ref.dtype)
    out_ref[0, 1, :, :] = (t * gate_t).astype(out_ref.dtype)


def _apply_gate_kernel(v_ref, t_ref, gv_ref, gt_ref, out_ref):
    # v_ref / t_ref : (1, tc, thw)     input blocks
    # gv_ref/gt_ref : (1, tc, 1)       per-channel f32 gates (residual folded in)
    # out_ref       : (1, 2, tc, thw)  fused output block
    v = v_ref[0].astype(_F32)            # f32 math is free (HBM-bound kernel)
    t = t_ref[0].astype(_F32)
    out_ref[0, 0, :, :] = (v * gv_ref[0]).astype(out_ref.dtype)
    out_ref[0, 1, :, :] = (t * gt_ref[0]).astype(out_ref.dtype)


# ----------------------------------------------------------------------------
# wrapper
# ----------------------------------------------------------------------------
def mutual_branch_co_attention(V, T, w1_v, w2_v, w1_t, w2_t, *,
                               use_residual=True,
                               max_c_tile=256, max_hw_tile=None,
                               force_streaming=False):
    """V, T: (B, C, H, W).  Weights in torch nn.Linear (out, in) layout:
       w1_*: (C//r, C), w2_*: (C, C//r).  Returns fused (B, 2C, H, W)."""
    B, C, H, W = V.shape
    HW = H * W
    itemsize = jnp.dtype(V.dtype).itemsize
    v3 = V.reshape(B, C, HW)
    t3 = T.reshape(B, C, HW)

    cap = _vmem_capacity_bytes()
    budget = int(0.85 * cap)

    # ---------------- residency check for the fused single-pass path --------
    slab = C * HW * itemsize                  # one (C, HW) slice of V or T
    out_slab = 2 * C * HW * itemsize          # (2, C, HW) output slice
    internal = 4 * C * HW * 4                 # f32 temporaries inside the body
    weights_b = 4 * C * w1_v.shape[0] * 4     # four (C, C//r) f32 weight blocks
    misc = 4 << 20
    need_dbl = 2 * (2 * slab + out_slab) + internal + weights_b + misc
    need_sgl = 2 * slab + 2 * out_slab + internal + weights_b + misc

    use_fused = (not force_streaming) and (need_sgl <= budget)
    single_buffer_inputs = use_fused and (need_dbl > budget)

    if use_fused:
        kernel = functools.partial(_fused_kernel, inv_hw=1.0 / HW,
                                   use_residual=use_residual)

        def vt_spec():
            if single_buffer_inputs:
                # v7x (64 MiB VMEM): keep the resident inputs single-buffered,
                # only the output tiles double-buffer.
                return pl.BlockSpec((1, C, HW), lambda b: (b, 0, 0),
                                    pipeline_mode=pl.Buffered(1))
            return pl.BlockSpec((1, C, HW), lambda b: (b, 0, 0))

        def w_spec():
            return pl.BlockSpec((C, w1_v.shape[0]), lambda b: (0, 0))

        vmem_limit = int(min(budget,
                             max(need_sgl if single_buffer_inputs else need_dbl,
                                 32 << 20)))
        cost = pl.CostEstimate(
            flops=int(8 * B * C * HW),
            transcendentals=int(2 * B * C),
            bytes_accessed=int(4 * B * C * HW * itemsize + weights_b))

        fused4 = pl.pallas_call(
            kernel,
            out_shape=jax.ShapeDtypeStruct((B, 2, C, HW), V.dtype),
            grid_spec=pltpu.PrefetchScalarGridSpec(
                num_scalar_prefetch=0,
                grid=(B,),                          # megacore shards over batch
                in_specs=[vt_spec(), vt_spec(),
                          w_spec(), w_spec(), w_spec(), w_spec()],
                out_specs=pl.BlockSpec((1, 2, C, HW), lambda b: (b, 0, 0, 0)),
            ),
            compiler_params=pltpu.CompilerParams(
                dimension_semantics=("parallel",),
                vmem_limit_bytes=vmem_limit),
            cost_estimate=cost,
        )(v3, t3,
          w1_v.T.astype(_F32), w2_v.astype(_F32),
          w1_t.T.astype(_F32), w2_t.astype(_F32))
        return fused4.reshape(B, 2 * C, H, W)

    # ---------------- streaming fallback -------------------------------------
    # Phase 1 (plain XLA, tiny): pools + gate MLPs, residual folded into gate.
    v_pool = jnp.mean(v3.astype(_F32), axis=-1)                     # (B, C)
    t_pool = jnp.mean(t3.astype(_F32), axis=-1)
    w1_vf, w2_vf = w1_v.astype(_F32), w2_v.astype(_F32)
    w1_tf, w2_tf = w1_t.astype(_F32), w2_t.astype(_F32)
    gate_v = jax.nn.sigmoid(jnp.einsum(
        'bh,ch->bc',
        jnp.maximum(jnp.einsum('bc,hc->bh', t_pool, w1_tf, precision=_HIGHEST), 0.0),
        w2_tf, precision=_HIGHEST))
    gate_t = jax.nn.sigmoid(jnp.einsum(
        'bh,ch->bc',
        jnp.maximum(jnp.einsum('bc,hc->bh', v_pool, w1_vf, precision=_HIGHEST), 0.0),
        w2_vf, precision=_HIGHEST))
    if use_residual:                          # fold residual:  x + x*g == x*(1+g)
        gate_v = gate_v + 1.0
        gate_t = gate_t + 1.0
    gate_v = gate_v[:, :, None]               # (B, C, 1)
    gate_t = gate_t[:, :, None]

    # Phase 2 (Pallas): streaming gate application over (B, C-tile, HW-tile).
    c_unit = _sublane_unit(V.dtype)           # dtype-aware sublane packing
    tc = _pick_tile(C, c_unit, max_c_tile)
    if max_hw_tile is None:
        # Size the spatial tile so double-buffered blocks use ~1/2 of VMEM.
        hw_budget = (cap // 4) // max(1, 4 * tc * itemsize)
        max_hw_tile = int(min(8192, max(128, hw_budget)))
    thw = _pick_tile(HW, 128, max_hw_tile)
    # TODO(synk): HW not a multiple of 128 (e.g. 7x7 late-stage maps) leaves the
    # stores lane-masked; padding in the wrapper would cost an extra HBM pass.
    grid = (B, pl.cdiv(C, tc), pl.cdiv(HW, thw))

    # VMEM budget: 2 inputs + 2 output halves per block; the (tc, 1) gate blocks
    # pad to (tc, 128) lanes in VMEM; everything double-buffered by the pipeline.
    per_set = 4 * tc * thw * itemsize + 2 * tc * 128 * 4
    vmem_limit = int(min(budget, max(2 * per_set + (4 << 20), 16 << 20)))

    cost = pl.CostEstimate(
        flops=int(4 * B * C * HW), transcendentals=0,
        bytes_accessed=int(4 * B * C * HW * itemsize + 2 * B * C * 4))

    fused4 = pl.pallas_call(
        _apply_gate_kernel,
        out_shape=jax.ShapeDtypeStruct((B, 2, C, HW), V.dtype),
        grid_spec=pltpu.PrefetchScalarGridSpec(
            num_scalar_prefetch=0,
            grid=grid,
            in_specs=[
                pl.BlockSpec((1, tc, thw), lambda b, c, s: (b, c, s)),   # V
                pl.BlockSpec((1, tc, thw), lambda b, c, s: (b, c, s)),   # T
                pl.BlockSpec((1, tc, 1),   lambda b, c, s: (b, c, 0)),   # gate_v
                pl.BlockSpec((1, tc, 1),   lambda b, c, s: (b, c, 0)),   # gate_t
            ],
            out_specs=pl.BlockSpec((1, 2, tc, thw), lambda b, c, s: (b, 0, c, s)),
        ),
        compiler_params=pltpu.CompilerParams(
            dimension_semantics=("parallel", "parallel", "parallel"),
            vmem_limit_bytes=vmem_limit),
        cost_estimate=cost,
    )(v3, t3, gate_v, gate_t)
    return fused4.reshape(B, 2 * C, H, W)


# ----------------------------------------------------------------------------
# reference + self-test
# ----------------------------------------------------------------------------
def _reference(V, T, w1_v, w2_v, w1_t, w2_t, use_residual=True):
    v_pool = jnp.mean(V, axis=(2, 3))
    t_pool = jnp.mean(T, axis=(2, 3))
    v_w = jax.nn.sigmoid(jnp.einsum(
        'bh,ch->bc',
        jnp.maximum(jnp.einsum('bc,hc->bh', t_pool, w1_t, precision=_HIGHEST), 0.0),
        w2_t, precision=_HIGHEST))[:, :, None, None]
    t_w = jax.nn.sigmoid(jnp.einsum(
        'bh,ch->bc',
        jnp.maximum(jnp.einsum('bc,hc->bh', v_pool, w1_v, precision=_HIGHEST), 0.0),
        w2_v, precision=_HIGHEST))[:, :, None, None]
    V_att, T_att = V * v_w, T * t_w
    V_out = V + V_att if use_residual else V_att
    T_out = T + T_att if use_residual else T_att
    return jnp.concatenate([V_out, T_out], axis=1)


if __name__ == "__main__":
    B, C, H, W = 2, 32, 16, 16        # HW = 256 -> lane-dense (multiple of 128)
    reduction = 16
    hidden = C // reduction

    key = jax.random.PRNGKey(0)
    k1, k2, k3, k4, k5, k6 = jax.random.split(key, 6)

    V = jax.random.normal(k1, (B, C, H, W), dtype=jnp.float32)
    T = jax.random.normal(k2, (B, C, H, W), dtype=jnp.float32)

    # torch nn.Linear (out, in) layout, no bias
    w1_v = 0.1 * jax.random.normal(k3, (hidden, C), dtype=jnp.float32)
    w2_v = 0.1 * jax.random.normal(k4, (C, hidden), dtype=jnp.float32)
    w1_t = 0.1 * jax.random.normal(k5, (hidden, C), dtype=jnp.float32)
    w2_t = 0.1 * jax.random.normal(k6, (C, hidden), dtype=jnp.float32)

    for use_residual in (True, False):
        ref = _reference(V, T, w1_v, w2_v, w1_t, w2_t, use_residual=use_residual)
        for force_streaming in (False, True):      # exercise both paths
            out = mutual_branch_co_attention(
                V, T, w1_v, w2_v, w1_t, w2_t,
                use_residual=use_residual, force_streaming=force_streaming)
            out = jax.block_until_ready(out)
            assert out.shape == (B, 2 * C, H, W)
            assert jnp.allclose(out, ref, atol=1e-5, rtol=1e-5), (
                f"mismatch vs reference (use_residual={use_residual}, "
                f"force_streaming={force_streaming})")

    print("KERNEL_OK")
</pallas_src>

<mosaic_0001>
module attributes {stable_mosaic.version = 11 : i64} {
  func.func @_fused_kernel(%arg0: i32, %arg1: memref<1x32x256xf32, #tpu.memory_space<vmem>>, %arg2: memref<1x32x256xf32, #tpu.memory_space<vmem>>, %arg3: memref<32x2xf32, #tpu.memory_space<vmem>>, %arg4: memref<32x2xf32, #tpu.memory_space<vmem>>, %arg5: memref<32x2xf32, #tpu.memory_space<vmem>>, %arg6: memref<32x2xf32, #tpu.memory_space<vmem>>, %arg7: memref<1x2x32x256xf32, #tpu.memory_space<vmem>>) attributes {dimension_semantics = [#tpu.dimension_semantics<parallel>], iteration_bounds = array<i64: 2>, scalar_prefetch = 0 : i64, scratch_operands = 0 : i64, tpu.core_type = #tpu.core_type<tc>, window_params = [{transform_indices = @transform_0, window_bounds = array<i64: 1, 32, 256>}, {transform_indices = @transform_1, window_bounds = array<i64: 1, 32, 256>}, {pipeline_mode = #tpu.pipeline_mode<synchronous>, transform_indices = @transform_2, window_bounds = array<i64: 32, 2>}, {pipeline_mode = #tpu.pipeline_mode<synchronous>, transform_indices = @transform_3, window_bounds = array<i64: 32, 2>}, {pipeline_mode = #tpu.pipeline_mode<synchronous>, transform_indices = @transform_4, window_bounds = array<i64: 32, 2>}, {pipeline_mode = #tpu.pipeline_mode<synchronous>, transform_indices = @transform_5, window_bounds = array<i64: 32, 2>}, {transform_indices = @transform_6, window_bounds = array<i64: 1, 2, 32, 256>}]} {
    %c0 = arith.constant 0 : index
    %c0_0 = arith.constant 0 : index
    %c0_1 = arith.constant 0 : index
    %0 = vector.load %arg1[%c0, %c0_0, %c0_1] : memref<1x32x256xf32, #tpu.memory_space<vmem>>, vector<1x32x256xf32>
    %1 = vector.shape_cast %0 : vector<1x32x256xf32> to vector<32x256xf32>
    %c0_2 = arith.constant 0 : index
    %c0_3 = arith.constant 0 : index
    %c0_4 = arith.constant 0 : index
    %2 = vector.load %arg2[%c0_2, %c0_3, %c0_4] : memref<1x32x256xf32, #tpu.memory_space<vmem>>, vector<1x32x256xf32>
    %3 = vector.shape_cast %2 : vector<1x32x256xf32> to vector<32x256xf32>
    %cst = arith.constant dense<0.000000e+00> : vector<32xf32>
    %4 = vector.multi_reduction <add>, %1, %cst [1] : vector<32x256xf32> to vector<32xf32>
    %5 = vector.shape_cast %4 : vector<32xf32> to vector<32x1xf32>
    %cst_5 = arith.constant 3.906250e-03 : f32
    %6 = vector.broadcast %cst_5 : f32 to vector<32x1xf32>
    %7 = arith.mulf %5, %6 : vector<32x1xf32>
    %cst_6 = arith.constant dense<0.000000e+00> : vector<32xf32>
    %8 = vector.multi_reduction <add>, %3, %cst_6 [1] : vector<32x256xf32> to vector<32xf32>
    %9 = vector.shape_cast %8 : vector<32xf32> to vector<32x1xf32>
    %cst_7 = arith.constant 3.906250e-03 : f32
    %10 = vector.broadcast %cst_7 : f32 to vector<32x1xf32>
    %11 = arith.mulf %9, %10 : vector<32x1xf32>
    %c0_8 = arith.constant 0 : index
    %c0_9 = arith.constant 0 : index
    %12 = vector.load %arg5[%c0_8, %c0_9] : memref<32x2xf32, #tpu.memory_space<vmem>>, vector<32x2xf32>
    %13 = vector.broadcast %11 : vector<32x1xf32> to vector<32x2xf32>
    %14 = arith.mulf %12, %13 : vector<32x2xf32>
    %cst_10 = arith.constant dense<0.000000e+00> : vector<2xf32>
    %15 = vector.multi_reduction <add>, %14, %cst_10 [0] : vector<32x2xf32> to vector<2xf32>
    %16 = vector.shape_cast %15 : vector<2xf32> to vector<1x2xf32>
    %cst_11 = arith.constant 0.000000e+00 : f32
    %17 = vector.broadcast %cst_11 : f32 to vector<1x2xf32>
    %18 = arith.maximumf %16, %17 : vector<1x2xf32>
    %c0_12 = arith.constant 0 : index
    %c0_13 = arith.constant 0 : index
    %19 = vector.load %arg6[%c0_12, %c0_13] : memref<32x2xf32, #tpu.memory_space<vmem>>, vector<32x2xf32>
    %20 = vector.broadcast %18 : vector<1x2xf32> to vector<32x2xf32>
    %21 = arith.mulf %19, %20 : vector<32x2xf32>
    %cst_14 = arith.constant dense<0.000000e+00> : vector<32xf32>
    %22 = vector.multi_reduction <add>, %21, %cst_14 [1] : vector<32x2xf32> to vector<32xf32>
    %23 = vector.shape_cast %22 : vector<32xf32> to vector<32x1xf32>
    %24 = arith.negf %23 : vector<32x1xf32>
    %25 = math.exp %24 : vector<32x1xf32>
    %cst_15 = arith.constant 1.000000e+00 : f32
    %26 = vector.broadcast %cst_15 : f32 to vector<32x1xf32>
    %27 = arith.addf %26, %25 : vector<32x1xf32>
    %28 = arith.divf %26, %27 : vector<32x1xf32>
    %c0_16 = arith.constant 0 : index
    %c0_17 = arith.constant 0 : index
    %29 = vector.load %arg3[%c0_16, %c0_17] : memref<32x2xf32, #tpu.memory_space<vmem>>, vector<32x2xf32>
    %30 = vector.broadcast %7 : vector<32x1xf32> to vector<32x2xf32>
    %31 = arith.mulf %29, %30 : vector<32x2xf32>
    %cst_18 = arith.constant dense<0.000000e+00> : vector<2xf32>
    %32 = vector.multi_reduction <add>, %31, %cst_18 [0] : vector<32x2xf32> to vector<2xf32>
    %33 = vector.shape_cast %32 : vector<2xf32> to vector<1x2xf32>
    %cst_19 = arith.constant 0.000000e+00 : f32
    %34 = vector.broadcast %cst_19 : f32 to vector<1x2xf32>
    %35 = arith.maximumf %33, %34 : vector<1x2xf32>
    %c0_20 = arith.constant 0 : index
    %c0_21 = arith.constant 0 : index
    %36 = vector.load %arg4[%c0_20, %c0_21] : memref<32x2xf32, #tpu.memory_space<vmem>>, vector<32x2xf32>
    %37 = vector.broadcast %35 : vector<1x2xf32> to vector<32x2xf32>
    %38 = arith.mulf %36, %37 : vector<32x2xf32>
    %cst_22 = arith.constant dense<0.000000e+00> : vector<32xf32>
    %39 = vector.multi_reduction <add>, %38, %cst_22 [1] : vector<32x2xf32> to vector<32xf32>
    %40 = vector.shape_cast %39 : vector<32xf32> to vector<32x1xf32>
    %41 = arith.negf %40 : vector<32x1xf32>
    %42 = math.exp %41 : vector<32x1xf32>
    %cst_23 = arith.constant 1.000000e+00 : f32
    %43 = vector.broadcast %cst_23 : f32 to vector<32x1xf32>
    %44 = arith.addf %43, %42 : vector<32x1xf32>
    %45 = arith.divf %43, %44 : vector<32x1xf32>
    %cst_24 = arith.constant 1.000000e+00 : f32
    %46 = vector.broadcast %cst_24 : f32 to vector<32x1xf32>
    %47 = arith.addf %28, %46 : vector<32x1xf32>
    %cst_25 = arith.constant 1.000000e+00 : f32
    %48 = vector.broadcast %cst_25 : f32 to vector<32x1xf32>
    %49 = arith.addf %45, %48 : vector<32x1xf32>
    %50 = vector.broadcast %47 : vector<32x1xf32> to vector<32x256xf32>
    %51 = arith.mulf %1, %50 : vector<32x256xf32>
    %c0_26 = arith.constant 0 : index
    %c0_27 = arith.constant 0 : index
    %c0_28 = arith.constant 0 : index
    %c0_29 = arith.constant 0 : index
    %52 = vector.load %arg7[%c0_26, %c0_27, %c0_28, %c0_29] : memref<1x2x32x256xf32, #tpu.memory_space<vmem>>, vector<1x1x32x256xf32>
    %53 = vector.shape_cast %52 : vector<1x1x32x256xf32> to vector<32x256xf32>
    %54 = vector.shape_cast %51 : vector<32x256xf32> to vector<1x1x32x256xf32>
    tpu.vector_store %arg7[%c0_26, %c0_27, %c0_28, %c0_29], %54 {strides = array<i32>} : memref<1x2x32x256xf32, #tpu.memory_space<vmem>>, vector<1x1x32x256xf32>,
    %55 = vector.broadcast %49 : vector<32x1xf32> to vector<32x256xf32>
    %56 = arith.mulf %3, %55 : vector<32x256xf32>
    %c0_30 = arith.constant 0 : index
    %c1 = arith.constant 1 : index
    %c0_31 = arith.constant 0 : index
    %c0_32 = arith.constant 0 : index
    %57 = vector.load %arg7[%c0_30, %c1, %c0_31, %c0_32] : memref<1x2x32x256xf32, #tpu.memory_space<vmem>>, vector<1x1x32x256xf32>
    %58 = vector.shape_cast %57 : vector<1x1x32x256xf32> to vector<32x256xf32>
    %59 = vector.shape_cast %56 : vector<32x256xf32> to vector<1x1x32x256xf32>
    tpu.vector_store %arg7[%c0_30, %c1, %c0_31, %c0_32], %59 {strides = array<i32>} : memref<1x2x32x256xf32, #tpu.memory_space<vmem>>, vector<1x1x32x256xf32>,
    return
  }
  func.func @transform_0(%arg0: i32) -> (i32, i32, i32) {
    %c0_i32 = arith.constant 0 : i32
    %c0_i32_0 = arith.constant 0 : i32
    %c0_i32_1 = arith.constant 0 : i32
    return %arg0, %c0_i32, %c0_i32_0 : i32, i32, i32
  }
  func.func @transform_1(%arg0: i32) -> (i32, i32, i32) {
    %c0_i32 = arith.constant 0 : i32
    %c0_i32_0 = arith.constant 0 : i32
    %c0_i32_1 = arith.constant 0 : i32
    return %arg0, %c0_i32, %c0_i32_0 : i32, i32, i32
  }
  func.func @transform_2(%arg0: i32) -> (i32, i32) {
    %c0_i32 = arith.constant 0 : i32
    %c0_i32_0 = arith.constant 0 : i32
    %c0_i32_1 = arith.constant 0 : i32
    return %c0_i32, %c0_i32_0 : i32, i32
  }
  func.func @transform_3(%arg0: i32) -> (i32, i32) {
    %c0_i32 = arith.constant 0 : i32
    %c0_i32_0 = arith.constant 0 : i32
    %c0_i32_1 = arith.constant 0 : i32
    return %c0_i32, %c0_i32_0 : i32, i32
  }
  func.func @transform_4(%arg0: i32) -> (i32, i32) {
    %c0_i32 = arith.constant 0 : i32
    %c0_i32_0 = arith.constant 0 : i32
    %c0_i32_1 = arith.constant 0 : i32
    return %c0_i32, %c0_i32_0 : i32, i32
  }
  func.func @transform_5(%arg0: i32) -> (i32, i32) {
    %c0_i32 = arith.constant 0 : i32
    %c0_i32_0 = arith.constant 0 : i32
    %c0_i32_1 = arith.constant 0 : i32
    return %c0_i32, %c0_i32_0 : i32, i32
  }
  func.func @transform_6(%arg0: i32) -> (i32, i32, i32, i32) {
    %c0_i32 = arith.constant 0 : i32
    %c0_i32_0 = arith.constant 0 : i32
    %c0_i32_1 = arith.constant 0 : i32
    %c0_i32_2 = arith.constant 0 : i32
    return %arg0, %c0_i32, %c0_i32_0, %c0_i32_1 : i32, i32, i32, i32
  }
}

</mosaic_0001>

<llo_original>
// kernel: tpu_custom_call.1
$region0: #{tpu_custom_call.1}
  #allocation0 [shape = 'u32[]', space=smem, size = 0x4, offset = 0x4, fixed_abs, tag = 'smem constant byte address 0x4 - core index']
  #allocation1 [shape = 'u32[144,128]{1,0:T(1,128)}', space=vmem, size = 0x12000, scoped, tag = 'internal scratch']
  %s0 = inlined_call_operand.vmem [shape: f32[2,32,256], index: 0, kind: input, shape index: {}]
  %s1 = inlined_call_operand.hbm [shape: f32[2,32,256], index: 1, kind: input, shape index: {}]
  %s2 = inlined_call_operand.vmem [shape: f32[32,2], index: 2, kind: input, shape index: {}]
  %s3 = inlined_call_operand.vmem [shape: f32[32,2], index: 3, kind: input, shape index: {}]
  %s4 = inlined_call_operand.vmem [shape: f32[32,2], index: 4, kind: input, shape index: {}]
  %s5 = inlined_call_operand.vmem [shape: f32[32,2], index: 5, kind: input, shape index: {}]
  %s6 = inlined_call_operand.hbm [shape: f32[2,2,32,256], index: 6, kind: output, shape index: {}]
  %s7 = sld [smem:[#allocation0]]
  $region61: #{tpu_custom_call.1} parent=0
    _
  %s9 = ssub.s32 1, %s7
  %s10 = scalar_select 0, %s9, %s7
  $region1: #{tpu_custom_call.1} parent=0
    #allocation2 [shape = 'u8[65536]{0}', space=vmem, size = 0x10000, scoped, tag = 'input window, operand 1']
    #allocation3 [shape = 's32[2]{0}', space=sflag, size = 0x8, scoped, tag = 'scoped memory for tpu_custom_call.1']
    #allocation4 [shape = 's32[2]{0}', space=sflag, size = 0x8, scoped, tag = 'scoped memory for tpu_custom_call.1']
    #allocation5 [shape = 'u8[131072]{0}', space=vmem, size = 0x20000, scoped, tag = 'output window, operand 0']
    %11 = vsyncpa [#allocation3], 0
    %s12 = scalar_lea.sflag [#allocation3], 1
    %13 = vsyncpa %s12, 0
    %14 = vsyncpa [#allocation4], 0
    %s15 = scalar_lea.sflag [#allocation4], 1
    %16 = vsyncpa %s15, 0
    loop: start=0, step=1, limit=4
    $region2: #{tpu_custom_call.1} parent=1 // loop_pre_header
      _
    $region3: #{tpu_custom_call.1} parent=1 // loop_header
      %s18 = sphi 0, %s22
      %p19 = scmp.ge.s32.totalorder %s18, 4
      %s28 = sphi 0, %s30
      %s31 = sphi 0, %s28
      %s32 = sphi 0, %s31
      %s48 = sphi 0, %s32
      %s54 = sphi 0, %s56
      %s57 = sphi 0, %s54
      %s58 = sphi 0, %s57
      %s74 = sphi 0, %s58
      %s78 = sphi 0, %s78
      %s80 = sphi 0, %s78
      %s81 = sphi 0, %s80
      %s95 = sphi 0, %s81
      %s99 = sphi 0, %s99
      %s101 = sphi 0, %s99
      %s102 = sphi 0, %s101
      %s116 = sphi 0, %s102
      %s120 = sphi 0, %s120
      %s122 = sphi 0, %s120
      %s123 = sphi 0, %s122
      %s137 = sphi 0, %s123
      %s141 = sphi 0, %s141
      %s143 = sphi 0, %s141
      %s144 = sphi 0, %s143
      %s158 = sphi 0, %s144
      %s164 = sphi 0, %s166
      %s167 = sphi 0, %s164
      %s168 = sphi 0, %s167
      %s184 = sphi 0, %s168
    $region4: #{tpu_custom_call.1} parent=1 // loop_header_branch
      %21 = sbr.rel (%p19) target = $region8
    $region5: #{tpu_custom_call.1} parent=1 // loop_body
      %s23 = ssub.s32 %s18, 1
      %s24 = ssub.s32 %s18, 2
      %s25 = sadd.s32 %s18, 1
      %s26 = ssub.s32 %s18, %s25
      %p27 = scmp.eq.s32.totalorder %s26, 0
      %s29 = sadd.s32 %s28, 1
      %s30 = scalar_select %p27, %s28, %s29
      %p33 = pneg %p27
      %p34 = scmp.eq.s32.totalorder %s18, 1
      %p35 = por %p33, %p34
      %p36 = scmp.ne.s32.totalorder %s28, %s31
      %p37 = scmp.eq.s32.totalorder %s18, 0
      %p38 = por %p36, %p37
      %p39 = scmp.ne.s32.totalorder %s28, %s31
      %p40 = scmp.eq.s32.totalorder %s23, 1
      %p41 = por %p39, %p40
      %p42 = scmp.ne.s32.totalorder %s31, %s32
      %p43 = scmp.eq.s32.totalorder %s23, 0
      %p44 = por %p42, %p43
      %p45 = scmp.ne.s32.totalorder %s31, %s32
      %p46 = scmp.eq.s32.totalorder %s24, 1
      %p47 = por %p45, %p46
      %p49 = scmp.ne.s32.totalorder %s32, %s48
      %p50 = scmp.eq.s32.totalorder %s24, 0
      %p51 = por %p49, %p50
      %s52 = ssub.s32 %s18, %s25
      %p53 = scmp.eq.s32.totalorder %s52, 0
      %s55 = sadd.s32 %s54, 1
      %s56 = scalar_select %p53, %s54, %s55
      %p59 = pneg %p53
      %p60 = scmp.eq.s32.totalorder %s18, 1
      %p61 = por %p59, %p60
      %p62 = scmp.ne.s32.totalorder %s54, %s57
      %p63 = scmp.eq.s32.totalorder %s18, 0
      %p64 = por %p62, %p63
      %p65 = scmp.ne.s32.totalorder %s54, %s57
      %p66 = scmp.eq.s32.totalorder %s23, 1
      %p67 = por %p65, %p66
      %p68 = scmp.ne.s32.totalorder %s57, %s58
      %p69 = scmp.eq.s32.totalorder %s23, 0
      %p70 = por %p68, %p69
      %p71 = scmp.ne.s32.totalorder %s57, %s58
      %p72 = scmp.eq.s32.totalorder %s24, 1
      %p73 = por %p71, %p72
      %p75 = scmp.ne.s32.totalorder %s58, %s74
      %p76 = scmp.eq.s32.totalorder %s24, 0
      %p77 = por %p75, %p76
      %s79 = sadd.s32 %s78, 1
      %p82 = scmp.eq.s32.totalorder %s18, 1
      %p83 = scmp.ne.s32.totalorder %s78, %s80
      %p84 = scmp.eq.s32.totalorder %s18, 0
      %p85 = por %p83, %p84
      %p86 = scmp.ne.s32.totalorder %s78, %s80
      %p87 = scmp.eq.s32.totalorder %s23, 1
      %p88 = por %p86, %p87
      %p89 = scmp.ne.s32.totalorder %s80, %s81
      %p90 = scmp.eq.s32.totalorder %s23, 0
      %p91 = por %p89, %p90
      %p92 = scmp.ne.s32.totalorder %s80, %s81
      %p93 = scmp.eq.s32.totalorder %s24, 1
      %p94 = por %p92, %p93
      %p96 = scmp.ne.s32.totalorder %s81, %s95
      %p97 = scmp.eq.s32.totalorder %s24, 0
      %p98 = por %p96, %p97
      %s100 = sadd.s32 %s99, 1
      %p103 = scmp.eq.s32.totalorder %s18, 1
      %p104 = scmp.ne.s32.totalorder %s99, %s101
      %p105 = scmp.eq.s32.totalorder %s18, 0
      %p106 = por %p104, %p105
      %p107 = scmp.ne.s32.totalorder %s99, %s101
      %p108 = scmp.eq.s32.totalorder %s23, 1
      %p109 = por %p107, %p108
      %p110 = scmp.ne.s32.totalorder %s101, %s102
      %p111 = scmp.eq.s32.totalorder %s23, 0
      %p112 = por %p110, %p111
      %p113 = scmp.ne.s32.totalorder %s101, %s102
      %p114 = scmp.eq.s32.totalorder %s24, 1
      %p115 = por %p113, %p114
      %p117 = scmp.ne.s32.totalorder %s102, %s116
      %p118 = scmp.eq.s32.totalorder %s24, 0
      %p119 = por %p117, %p118
      %s121 = sadd.s32 %s120, 1
      %p124 = scmp.eq.s32.totalorder %s18, 1
      %p125 = scmp.ne.s32.totalorder %s120, %s122
      %p126 = scmp.eq.s32.totalorder %s18, 0
      %p127 = por %p125, %p126
      %p128 = scmp.ne.s32.totalorder %s120, %s122
      %p129 = scmp.eq.s32.totalorder %s23, 1
      %p130 = por %p128, %p129
      %p131 = scmp.ne.s32.totalorder %s122, %s123
      %p132 = scmp.eq.s32.totalorder %s23, 0
      %p133 = por %p131, %p132
      %p134 = scmp.ne.s32.totalorder %s122, %s123
      %p135 = scmp.eq.s32.totalorder %s24, 1
      %p136 = por %p134, %p135
      %p138 = scmp.ne.s32.totalorder %s123, %s137
      %p139 = scmp.eq.s32.totalorder %s24, 0
      %p140 = por %p138, %p139
      %s142 = sadd.s32 %s141, 1
      %p145 = scmp.eq.s32.totalorder %s18, 1
      %p146 = scmp.ne.s32.totalorder %s141, %s143
      %p147 = scmp.eq.s32.totalorder %s18, 0
      %p148 = por %p146, %p147
      %p149 = scmp.ne.s32.totalorder %s141, %s143
      %p150 = scmp.eq.s32.totalorder %s23, 1
      %p151 = por %p149, %p150
      %p152 = scmp.ne.s32.totalorder %s143, %s144
      %p153 = scmp.eq.s32.totalorder %s23, 0
      %p154 = por %p152, %p153
      %p155 = scmp.ne.s32.totalorder %s143, %s144
      %p156 = scmp.eq.s32.totalorder %s24, 1
      %p157 = por %p155, %p156
      %p159 = scmp.ne.s32.totalorder %s144, %s158
      %p160 = scmp.eq.s32.totalorder %s24, 0
      %p161 = por %p159, %p160
      %s162 = ssub.s32 %s18, %s25
      %p163 = scmp.eq.s32.totalorder %s162, 0
      %s165 = sadd.s32 %s164, 1
      %s166 = scalar_select %p163, %s164, %s165
      %p169 = pneg %p163
      %p170 = scmp.eq.s32.totalorder %s18, 1
      %p171 = por %p169, %p170
      %p172 = scmp.ne.s32.totalorder %s164, %s167
      %p173 = scmp.eq.s32.totalorder %s18, 0
      %p174 = por %p172, %p173
      %p175 = scmp.ne.s32.totalorder %s164, %s167
      %p176 = scmp.eq.s32.totalorder %s23, 1
      %p177 = por %p175, %p176
      %p178 = scmp.ne.s32.totalorder %s167, %s168
      %p179 = scmp.eq.s32.totalorder %s23, 0
      %p180 = por %p178, %p179
      %p181 = scmp.ne.s32.totalorder %s167, %s168
      %p182 = scmp.eq.s32.totalorder %s24, 1
      %p183 = por %p181, %p182
      %p185 = scmp.ne.s32.totalorder %s168, %s184
      %p186 = scmp.eq.s32.totalorder %s24, 0
      %p187 = por %p185, %p186
      %p188 = scmp.le.s32.totalorder 1, %s18
      %p189 = scmp.lt.s32.totalorder %s18, 3
      %p190 = pnand %p188, %p189
      %p191 = pneg %p190
      // Predicated region
      $region9: #{tpu_custom_call.1} parent=5 // pred_check
        _
      $region10: #{tpu_custom_call.1} parent=5 // pred_check_branch
        %193 = sbr.rel (%p190) target = $region12
      $region11: #{tpu_custom_call.1} parent=5 // pred_region
        %s194 = ssub.s32 %s18, 1
        // Predicated region
        $region13: #{tpu_custom_call.1} parent=11 // pred_check
          %p195 = pneg %p91
        $region14: #{tpu_custom_call.1} parent=11 // pred_check_branch
          %197 = sbr.rel (%p195) target = $region16
        $region15: #{tpu_custom_call.1} parent=11 // pred_region
          _
        $region16: #{tpu_custom_call.1} parent=11 // pred_fallthru
          _
        // Predicated region
        $region17: #{tpu_custom_call.1} parent=11 // pred_check
          %p198 = pneg %p112
        $region18: #{tpu_custom_call.1} parent=11 // pred_check_branch
          %200 = sbr.rel (%p198) target = $region20
        $region19: #{tpu_custom_call.1} parent=11 // pred_region
          _
        $region20: #{tpu_custom_call.1} parent=11 // pred_fallthru
          _
        // Predicated region
        $region21: #{tpu_custom_call.1} parent=11 // pred_check
          %p201 = pneg %p133
        $region22: #{tpu_custom_call.1} parent=11 // pred_check_branch
          %203 = sbr.rel (%p201) target = $region24
        $region23: #{tpu_custom_call.1} parent=11 // pred_region
          _
        $region24: #{tpu_custom_call.1} parent=11 // pred_fallthru
          _
        // Predicated region
        $region25: #{tpu_custom_call.1} parent=11 // pred_check
          %p204 = pneg %p154
        $region26: #{tpu_custom_call.1} parent=11 // pred_check_branch
          %206 = sbr.rel (%p204) target = $region28
        $region27: #{tpu_custom_call.1} parent=11 // pred_region
          _
        $region28: #{tpu_custom_call.1} parent=11 // pred_fallthru
          _
      $region12: #{tpu_custom_call.1} parent=5 // pred_fallthru
        _
      %p207 = scmp.lt.s32.totalorder %s18, 2
      // Predicated region
      $region29: #{tpu_custom_call.1} parent=5 // pred_check
        %p208 = pneg %p207
      $region30: #{tpu_custom_call.1} parent=5 // pred_check_branch
        %210 = sbr.rel (%p208) target = $region32
      $region31: #{tpu_custom_call.1} parent=5 // pred_region
        // Predicated region
        $region33: #{tpu_custom_call.1} parent=31 // pred_check
          %p211 = pneg %p38
        $region34: #{tpu_custom_call.1} parent=31 // pred_check_branch
          %213 = sbr.rel (%p211) target = $region36
        $region35: #{tpu_custom_call.1} parent=31 // pred_region
          %p214 = scmp.lt.s32.totalorder %s18, 1
          %s215 = scalar_select %p214, %s18, 1
          %s216 = smul.addr %s215, 8
          %s217 = smul.addr %s216, 8
          %s218 = scalar_lea.vmem %s0, %s217
        $region36: #{tpu_custom_call.1} parent=31 // pred_fallthru
          _
        // Predicated region
        $region37: #{tpu_custom_call.1} parent=31 // pred_check
          %p219 = pneg %p64
        $region38: #{tpu_custom_call.1} parent=31 // pred_check_branch
          %221 = sbr.rel (%p219) target = $region40
        $region39: #{tpu_custom_call.1} parent=31 // pred_region
          %s222 = sand.u32 %s54, 1
          %s223 = scalar_lea.sflag [#allocation3], %s222
          %s224 = sand.u32 %s54, 1
          %s225 = smul.addr %s224, 64
          %s226 = scalar_lea.vmem [#allocation2], %s225
          %s228 = ssub.s32 1024, 1024
          %229 = vsyncadd %s223, %s228
          %s230 = smul.addr %s18, 8
          %s231 = smul.addr %s230, 128
          %s232 = scalar_lea.hbm %s1, %s231
          %s233 = sshll.u32 %s226, 4
          %s234 = int_to_ptr.vmem [resolvable:$true] %s233
          %239 = dma.hbm_to_vmem [thread:$0]  %s232, 1024, %s234, %s223, 256, 256, 16
        $region40: #{tpu_custom_call.1} parent=31 // pred_fallthru
          _
      $region32: #{tpu_custom_call.1} parent=5 // pred_fallthru
        _
      %p240 = scmp.le.s32.totalorder 1, %s18
      %p241 = scmp.lt.s32.totalorder %s18, 3
      %p242 = pnand %p240, %p241
      %p243 = pneg %p242
      // Predicated region
      $region41: #{tpu_custom_call.1} parent=5 // pred_check
        _
      $region42: #{tpu_custom_call.1} parent=5 // pred_check_branch
        %245 = sbr.rel (%p242) target = $region44
      $region43: #{tpu_custom_call.1} parent=5 // pred_region
        %s246 = ssub.s32 %s18, 1
        %s247 = sand.u32 %s57, 1
        %s248 = scalar_lea.sflag [#allocation3], %s247
        %s249 = sand.u32 %s57, 1
        %s250 = smul.addr %s249, 64
        %s251 = scalar_lea.vmem [#allocation2], %s250
        // Predicated region
        $region45: #{tpu_custom_call.1} parent=43 // pred_check
          %p252 = pneg %p70
        $region46: #{tpu_custom_call.1} parent=43 // pred_check_branch
          %254 = sbr.rel (%p252) target = $region48
        $region47: #{tpu_custom_call.1} parent=43 // pred_region
          %255 = dma.done %s248, 1024
        $region48: #{tpu_custom_call.1} parent=43 // pred_fallthru
          _
        %p256 = scmp.lt.s32.totalorder %s23, 1
        %s257 = scalar_select %p256, %s23, 1
        %s258 = smul.addr %s257, 8
        %s259 = smul.addr %s258, 8
        %s260 = scalar_lea.vmem %s0, %s259
        %p261 = pneg %p44
        %p262 = pneg %p41
        %s263 = sand.u32 %s57, 1
        %s264 = scalar_lea.sflag [#allocation3], %s263
        %s265 = sand.u32 %s57, 1
        %s266 = smul.addr %s265, 64
        %s267 = scalar_lea.vmem [#allocation2], %s266
        %p268 = pneg %p70
        %p269 = pneg %p67
        %p270 = pneg %p91
        %p271 = pneg %p88
        %p272 = pneg %p112
        %p273 = pneg %p109
        %p274 = pneg %p133
        %p275 = pneg %p130
        %p276 = pneg %p154
        %p277 = pneg %p151
        %p278 = pneg %p180
        %p279 = pneg %p177
        %s280 = sand.u32 %s167, 1
        %s281 = scalar_lea.sflag [#allocation4], %s280
        %s282 = sand.u32 %s167, 1
        %s283 = smul.addr %s282, 128
        %s284 = scalar_lea.vmem [#allocation5], %s283
        %p285 = scmp.lt.s32.totalorder %s23, 1
        %s286 = scalar_select %p285, %s23, 1
        %s287 = smul.addr %s286, 8
        %s288 = smul.addr %s287, 8
        %s289 = scalar_lea.vmem %s0, %s288
        %v290 = vld [vmem:[%s289] sm:$0xff]
        %v291 = vld [vmem:[%s289 + $0x8] sm:$0xff]
        %v292 = vld [vmem:[%s289 + $0x10] sm:$0xff]
        %v293 = vld [vmem:[%s289 + $0x18] sm:$0xff]
        %v294 = vld [vmem:[%s289 + $0x20] sm:$0xff]
        %v295 = vld [vmem:[%s289 + $0x28] sm:$0xff]
        %v296 = vld [vmem:[%s289 + $0x30] sm:$0xff]
        %v297 = vld [vmem:[%s289 + $0x38] sm:$0xff]
        %v298 = vld [vmem:[%s251] sm:$0xff]
        %v299 = vld [vmem:[%s251 + $0x8] sm:$0xff]
        %v300 = vld [vmem:[%s251 + $0x10] sm:$0xff]
        %v301 = vld [vmem:[%s251 + $0x18] sm:$0xff]
        %v302 = vld [vmem:[%s251 + $0x20] sm:$0xff]
        %v303 = vld [vmem:[%s251 + $0x28] sm:$0xff]
        %v304 = vld [vmem:[%s251 + $0x30] sm:$0xff]
        %v305 = vld [vmem:[%s251 + $0x38] sm:$0xff]
        %v306 = vadd.f32 %v290, %v291
        %307 = vadd.xlane.f32.xlu0 %v306
        %v308 = vpop.xlane.xlu0 %307
        %v309 = vadd.f32 %v292, %v293
        %310 = vadd.xlane.f32.xlu0 %v309
        %v311 = vpop.xlane.xlu0 %310
        %v312 = vadd.f32 %v294, %v295
        %313 = vadd.xlane.f32.xlu0 %v312
        %v314 = vpop.xlane.xlu0 %313
        %v315 = vadd.f32 %v296, %v297
        %316 = vadd.xlane.f32.xlu0 %v315
        %v317 = vpop.xlane.xlu0 %316
        %v318 = vmul.f32 %v308, 0.00390625
        %v319 = vmul.f32 %v311, 0.00390625
        %v320 = vmul.f32 %v314, 0.00390625
        %v321 = vmul.f32 %v317, 0.00390625
        %v322 = vadd.f32 %v298, %v299
        %323 = vadd.xlane.f32.xlu0 %v322
        %v324 = vpop.xlane.xlu0 %323
        %v325 = vadd.f32 %v300, %v301
        %326 = vadd.xlane.f32.xlu0 %v325
        %v327 = vpop.xlane.xlu0 %326
        %v328 = vadd.f32 %v302, %v303
        %329 = vadd.xlane.f32.xlu0 %v328
        %v330 = vpop.xlane.xlu0 %329
        %v331 = vadd.f32 %v304, %v305
        %332 = vadd.xlane.f32.xlu0 %v331
        %v333 = vpop.xlane.xlu0 %332
        %v334 = vmul.f32 %v324, 0.00390625
        %v335 = vmul.f32 %v327, 0.00390625
        %v336 = vmul.f32 %v330, 0.00390625
        %v337 = vmul.f32 %v333, 0.00390625
        %v338 = vld [vmem:[%s4] sm:$0xff]
        %v339 = vld [vmem:[%s4 + $0x8] sm:$0xff]
        %v340 = vld [vmem:[%s4 + $0x10] sm:$0xff]
        %v341 = vld [vmem:[%s4 + $0x18] sm:$0xff]
        %v342 = vmul.f32 %v338, %v334
        %v343 = vmul.f32 %v339, %v335
        %v344 = vmul.f32 %v340, %v336
        %v345 = vmul.f32 %v341, %v337
        %vm346 = vcmask 15360
        %v347 = vsel %vm346, %v342, 0.0
        %v348 = vsel %vm346, %v343, 0.0
        %v349 = vadd.f32 %v347, %v348
        %v350 = vsel %vm346, %v344, 0.0
        %v351 = vadd.f32 %v349, %v350
        %v352 = vsel %vm346, %v345, 0.0
        %v353 = vadd.f32 %v351, %v352
        %v354 = vrot.slane %v353, 4
        %v355 = vadd.f32 %v353, %v354
        %v356 = vrot.slane %v355, 2
        %v357 = vadd.f32 %v355, %v356
        %v358 = vrot.slane %v357, 1
        %v359 = vadd.f32 %v357, %v358
        %v360 = vmax.f32 %v359, 0.0
        %v361 = vld [vmem:[%s5] sm:$0xff]
        %v362 = vld [vmem:[%s5 + $0x8] sm:$0xff]
        %v363 = vld [vmem:[%s5 + $0x10] sm:$0xff]
        %v364 = vld [vmem:[%s5 + $0x18] sm:$0xff]
        %v365 = vmul.f32 %v361, %v360
        %v366 = vmul.f32 %v362, %v360
        %v367 = vmul.f32 %v363, %v360
        %v368 = vmul.f32 %v364, %v360
        %v369 = vsel %vm346, %v365, 0.0
        %370 = vadd.xlane.f32.xlu0 %v369
        %v371 = vpop.xlane.xlu0 %370
        %v372 = vsel %vm346, %v366, 0.0
        %373 = vadd.xlane.f32.xlu0 %v372
        %v374 = vpop.xlane.xlu0 %373
        %v375 = vsel %vm346, %v367, 0.0
        %376 = vadd.xlane.f32.xlu0 %v375
        %v377 = vpop.xlane.xlu0 %376
        %v378 = vsel %vm346, %v368, 0.0
        %379 = vadd.xlane.f32.xlu0 %v378
        %v380 = vpop.xlane.xlu0 %379
        %v381 = vxor.u32 %v371, 2147483648
        %v382 = vxor.u32 %v374, 2147483648
        %v383 = vxor.u32 %v377, 2147483648
        %v384 = vxor.u32 %v380, 2147483648
        %v385 = vmul.f32 %v381, 1.442695
        %v386 = vpow.pop %v385
        %v387 = vmul.f32 %v382, 1.442695
        %v388 = vpow.pop %v387
        %v389 = vmul.f32 %v383, 1.442695
        %v390 = vpow.pop %v389
        %v391 = vmul.f32 %v384, 1.442695
        %v392 = vpow.pop %v391
        %v393 = vadd.f32 %v386, 1.0
        %v394 = vadd.f32 %v388, 1.0
        %v395 = vadd.f32 %v390, 1.0
        %v396 = vadd.f32 %v392, 1.0
        %v397 = vrcp.pop %v393
        %v398 = vmul.f32 1.0, %v397
        %v399 = vrcp.pop %v394
        %v400 = vmul.f32 1.0, %v399
        %v401 = vrcp.pop %v395
        %v402 = vmul.f32 1.0, %v401
        %v403 = vrcp.pop %v396
        %v404 = vmul.f32 1.0, %v403
        %v405 = vld [vmem:[%s2] sm:$0xff]
        %v406 = vld [vmem:[%s2 + $0x8] sm:$0xff]
        %v407 = vld [vmem:[%s2 + $0x10] sm:$0xff]
        %v408 = vld [vmem:[%s2 + $0x18] sm:$0xff]
        %v409 = vmul.f32 %v405, %v318
        %v410 = vmul.f32 %v406, %v319
        %v411 = vmul.f32 %v407, %v320
        %v412 = vmul.f32 %v408, %v321
        %v413 = vsel %vm346, %v409, 0.0
        %v414 = vsel %vm346, %v410, 0.0
        %v415 = vadd.f32 %v413, %v414
        %v416 = vsel %vm346, %v411, 0.0
        %v417 = vadd.f32 %v415, %v416
        %v418 = vsel %vm346, %v412, 0.0
        %v419 = vadd.f32 %v417, %v418
        %v420 = vrot.slane %v419, 4
        %v421 = vadd.f32 %v419, %v420
        %v422 = vrot.slane %v421, 2
        %v423 = vadd.f32 %v421, %v422
        %v424 = vrot.slane %v423, 1
        %v425 = vadd.f32 %v423, %v424
        %v426 = vmax.f32 %v425, 0.0
        %v427 = vld [vmem:[%s3] sm:$0xff]
        %v428 = vld [vmem:[%s3 + $0x8] sm:$0xff]
        %v429 = vld [vmem:[%s3 + $0x10] sm:$0xff]
        %v430 = vld [vmem:[%s3 + $0x18] sm:$0xff]
        %v431 = vmul.f32 %v427, %v426
        %v432 = vmul.f32 %v428, %v426
        %v433 = vmul.f32 %v429, %v426
        %v434 = vmul.f32 %v430, %v426
        %v435 = vsel %vm346, %v431, 0.0
        %436 = vadd.xlane.f32.xlu0 %v435
        %v437 = vpop.xlane.xlu0 %436
        %v438 = vsel %vm346, %v432, 0.0
        %439 = vadd.xlane.f32.xlu0 %v438
        %v440 = vpop.xlane.xlu0 %439
        %v441 = vsel %vm346, %v433, 0.0
        %442 = vadd.xlane.f32.xlu0 %v441
        %v443 = vpop.xlane.xlu0 %442
        %v444 = vsel %vm346, %v434, 0.0
        %445 = vadd.xlane.f32.xlu0 %v444
        %v446 = vpop.xlane.xlu0 %445
        %v447 = vxor.u32 %v437, 2147483648
        %v448 = vxor.u32 %v440, 2147483648
        %v449 = vxor.u32 %v443, 2147483648
        %v450 = vxor.u32 %v446, 2147483648
        %v451 = vmul.f32 %v447, 1.442695
        %v452 = vpow.pop %v451
        %v453 = vmul.f32 %v448, 1.442695
        %v454 = vpow.pop %v453
        %v455 = vmul.f32 %v449, 1.442695
        %v456 = vpow.pop %v455
        %v457 = vmul.f32 %v450, 1.442695
        %v458 = vpow.pop %v457
        %v459 = vadd.f32 %v452, 1.0
        %v460 = vadd.f32 %v454, 1.0
        %v461 = vadd.f32 %v456, 1.0
        %v462 = vadd.f32 %v458, 1.0
        %v463 = vrcp.pop %v459
        %v464 = vmul.f32 1.0, %v463
        %v465 = vrcp.pop %v460
        %v466 = vmul.f32 1.0, %v465
        %v467 = vrcp.pop %v461
        %v468 = vmul.f32 1.0, %v467
        %v469 = vrcp.pop %v462
        %v470 = vmul.f32 1.0, %v469
        %v471 = vadd.f32 %v398, 1.0
        %v472 = vadd.f32 %v400, 1.0
        %v473 = vadd.f32 %v402, 1.0
        %v474 = vadd.f32 %v404, 1.0
        %v475 = vadd.f32 %v464, 1.0
        %v476 = vadd.f32 %v466, 1.0
        %v477 = vadd.f32 %v468, 1.0
        %v478 = vadd.f32 %v470, 1.0
        %v479 = vmul.f32 %v290, %v471
        %v480 = vmul.f32 %v291, %v471
        %v481 = vmul.f32 %v292, %v472
        %v482 = vmul.f32 %v293, %v472
        %v483 = vmul.f32 %v294, %v473
        %v484 = vmul.f32 %v295, %v473
        %v485 = vmul.f32 %v296, %v474
        %v486 = vmul.f32 %v297, %v474
        %487 = vst [vmem:[%s284] sm:$0xff] %v479
        %488 = vst [vmem:[%s284 + $0x8] sm:$0xff] %v480
        %489 = vst [vmem:[%s284 + $0x10] sm:$0xff] %v481
        %490 = vst [vmem:[%s284 + $0x18] sm:$0xff] %v482
        %491 = vst [vmem:[%s284 + $0x20] sm:$0xff] %v483
        %492 = vst [vmem:[%s284 + $0x28] sm:$0xff] %v484
        %493 = vst [vmem:[%s284 + $0x30] sm:$0xff] %v485
        %494 = vst [vmem:[%s284 + $0x38] sm:$0xff] %v486
        %v495 = vmul.f32 %v298, %v475
        %v496 = vmul.f32 %v299, %v475
        %v497 = vmul.f32 %v300, %v476
        %v498 = vmul.f32 %v301, %v476
        %v499 = vmul.f32 %v302, %v477
        %v500 = vmul.f32 %v303, %v477
        %v501 = vmul.f32 %v304, %v478
        %v502 = vmul.f32 %v305, %v478
        %s503 = scalar_lea.vmem %s284, 64 [#allocation5]
        %504 = vst [vmem:[%s503] sm:$0xff] %v495
        %505 = vst [vmem:[%s503 + $0x8] sm:$0xff] %v496
        %506 = vst [vmem:[%s503 + $0x10] sm:$0xff] %v497
        %507 = vst [vmem:[%s503 + $0x18] sm:$0xff] %v498
        %508 = vst [vmem:[%s503 + $0x20] sm:$0xff] %v499
        %509 = vst [vmem:[%s503 + $0x28] sm:$0xff] %v500
        %510 = vst [vmem:[%s503 + $0x30] sm:$0xff] %v501
        %511 = vst [vmem:[%s503 + $0x38] sm:$0xff] %v502
        %s512 = sand.u32 %s167, 1
        %s513 = scalar_lea.sflag [#allocation4], %s512
        %s514 = sand.u32 %s167, 1
        %s515 = smul.addr %s514, 128
        %s516 = scalar_lea.vmem [#allocation5], %s515
        // Predicated region
        $region49: #{tpu_custom_call.1} parent=43 // pred_check
          %p517 = pneg %p177
        $region50: #{tpu_custom_call.1} parent=43 // pred_check_branch
          %519 = sbr.rel (%p517) target = $region52
        $region51: #{tpu_custom_call.1} parent=43 // pred_region
          %s521 = ssub.s32 2048, 2048
          %522 = vsyncadd %s513, %s521
          %s523 = smul.addr %s23, 16
          %s524 = smul.addr %s523, 128
          %s525 = scalar_lea.hbm %s6, %s524
          %s526 = sshll.u32 %s516, 4
          %s527 = int_to_ptr.vmem [resolvable:$true] %s526
          %532 = dma.vmem_to_hbm [thread:$0]  %s527, 2048, %s525, %s513, 256, 256, 16
        $region52: #{tpu_custom_call.1} parent=43 // pred_fallthru
          _
      $region44: #{tpu_custom_call.1} parent=5 // pred_fallthru
        _
      %p533 = scmp.le.s32.totalorder 2, %s18
      // Predicated region
      $region53: #{tpu_custom_call.1} parent=5 // pred_check
        %p534 = pneg %p533
      $region54: #{tpu_custom_call.1} parent=5 // pred_check_branch
        %536 = sbr.rel (%p534) target = $region56
      $region55: #{tpu_custom_call.1} parent=5 // pred_region
        %s537 = ssub.s32 %s18, 2
        // Predicated region
        $region57: #{tpu_custom_call.1} parent=55 // pred_check
          %p538 = pneg %p183
        $region58: #{tpu_custom_call.1} parent=55 // pred_check_branch
          %540 = sbr.rel (%p538) target = $region60
        $region59: #{tpu_custom_call.1} parent=55 // pred_region
          %s541 = sand.u32 %s168, 1
          %s542 = scalar_lea.sflag [#allocation4], %s541
          %s543 = sand.u32 %s168, 1
          %s544 = smul.addr %s543, 128
          %s545 = scalar_lea.vmem [#allocation5], %s544
          %546 = dma.done %s542, 2048
        $region60: #{tpu_custom_call.1} parent=55 // pred_fallthru
          _
      $region56: #{tpu_custom_call.1} parent=5 // pred_fallthru
        _
    $region6: #{tpu_custom_call.1} parent=1 // loop_footer
      %s22 = sadd.s32 1, %s18
    $region7: #{tpu_custom_call.1} parent=1 // loop_footer_branch
      %17 = sbr.rel target = $region3
    $region8: #{tpu_custom_call.1} parent=1 // loop_exit
      _
    %547 = vsyncpa [#allocation3], 1
    %s548 = scalar_lea.sflag [#allocation3], 1
    %549 = vsyncpa %s548, 1
    %550 = vsyncpa [#allocation4], 1
    %s551 = scalar_lea.sflag [#allocation4], 1
    %552 = vsyncpa %s551, 1

</llo_original>
